<compile_context>
chip_gen: v5e
topology: v5e:2x2
jax: 0.10.0
libtpu: 0.0.40
codegen_flags: <defaults>
</compile_context>

<pallas_src>
import functools

import jax
import jax.numpy as jnp
from jax import lax
from jax.experimental import pallas as pl
from jax.experimental.pallas import tpu as pltpu

LANES = 128
SMOOTH = 1e-5


def _make_dice_sums_kernel(n_classes, tile_sub, hw, needs_mask, softmax):
    """Kernel computing per-(batch, chunk) partial sums for each class.

    Refs:
      score_ref : VMEM (C, TILE_SUB, 128)  model-dtype logits/probs for one chunk
      target_ref: VMEM (TILE_SUB, 128)     int32 labels for the same chunk
      out_ref   : VMEM (3, C) float32      rows = [intersect, z_sum, y_sum]
    """

    def kernel(score_ref, target_ref, out_ref):
        score = score_ref[...].astype(jnp.float32)      # (C, TS, 128)
        labels = target_ref[...]                        # (TS, 128) int32

        if needs_mask:
            ch = pl.program_id(1)
            sub = lax.broadcasted_iota(jnp.int32, (tile_sub, LANES), 0)
            lane = lax.broadcasted_iota(jnp.int32, (tile_sub, LANES), 1)
            pos = (ch * tile_sub + sub) * LANES + lane
            valid = pos < hw
            labels = jnp.where(valid, labels, -1)       # never matches a class

        if softmax:
            # Fused channel softmax (axis 0 of the block == class axis).
            m = jnp.max(score, axis=0, keepdims=True)
            e = jnp.exp(score - m)
            score = e / jnp.sum(e, axis=0, keepdims=True)

        if needs_mask:
            # Zero out padded / out-of-bounds spatial positions (important when
            # softmax turned padded zeros into 1/C, or when the ragged last
            # chunk read undefined data).
            score = jnp.where(valid[None, :, :], score, 0.0)

        # Build the (3, C) output block with broadcast+select so the store is a
        # single full-block vector store.
        row = lax.broadcasted_iota(jnp.int32, (3, n_classes), 0)
        col = lax.broadcasted_iota(jnp.int32, (3, n_classes), 1)
        out = jnp.zeros((3, n_classes), dtype=jnp.float32)
        for i in range(n_classes):
            s_i = score[i]
            match = labels == i
            intersect = jnp.sum(jnp.where(match, s_i, 0.0))
            y_sum = jnp.sum(jnp.where(match, 1.0, 0.0))   # one-hot is 0/1
            z_sum = jnp.sum(s_i * s_i)
            out = jnp.where((row == 0) & (col == i), intersect, out)
            out = jnp.where((row == 1) & (col == i), z_sum, out)
            out = jnp.where((row == 2) & (col == i), y_sum, out)
        out_ref[...] = out

    return kernel


@functools.partial(jax.jit, static_argnames=("n_classes", "softmax"))
def dice_loss(inputs, target, *, n_classes, weight=None, softmax=False):
    """Pallas implementation of DiceLoss.forward.

    inputs: (B, C, H, W) float (NCHW, like the PyTorch module; any float dtype)
    target: (B, H, W) integer class labels in [0, n_classes)
    """
    B, C, H, W = inputs.shape
    assert C == n_classes
    HW = H * W
    n_sub = pl.cdiv(HW, LANES)

    # Tile the spatial axis: aim for ~2 MiB of score data per block.
    dtype_bytes = jnp.dtype(inputs.dtype).itemsize
    budget = 2 * 1024 * 1024
    tile_sub = max(8, budget // (n_classes * LANES * dtype_bytes))
    tile_sub = min(2048, tile_sub)
    tile_sub = (tile_sub // 8) * 8
    if tile_sub >= n_sub:
        tile_sub = n_sub
    n_chunks = pl.cdiv(n_sub, tile_sub)
    needs_mask = (n_chunks * tile_sub * LANES) != HW

    # Copy-free reshapes (padding only materializes when HW % 128 != 0).
    score = inputs.reshape(B, C, HW)
    tgt = target.reshape(B, HW).astype(jnp.int32)
    if HW % LANES != 0:
        pad = n_sub * LANES - HW
        score = jnp.pad(score, ((0, 0), (0, 0), (0, pad)))
        tgt = jnp.pad(tgt, ((0, 0), (0, pad)), constant_values=-1)
    score = score.reshape(B, C, n_sub, LANES)
    tgt = tgt.reshape(B, n_sub, LANES)

    kernel = _make_dice_sums_kernel(n_classes, tile_sub, HW, needs_mask, softmax)

    block_bytes = (n_classes * tile_sub * LANES * dtype_bytes
                   + tile_sub * LANES * 4)
    vmem_limit = int(max(4 * block_bytes + (1 << 20), 16 * 1024 * 1024))

    partial = pl.pallas_call(
        kernel,
        out_shape=jax.ShapeDtypeStruct((B, n_chunks, 3, n_classes), jnp.float32),
        grid=(B, n_chunks),
        in_specs=[
            # score: all classes of one (batch, chunk) tile.
            pl.BlockSpec((None, n_classes, tile_sub, LANES),
                         lambda b, ch: (b, 0, ch, 0)),
            # target: the matching labels tile (read exactly once).
            pl.BlockSpec((None, tile_sub, LANES),
                         lambda b, ch: (b, ch, 0)),
        ],
        out_specs=pl.BlockSpec((None, None, 3, n_classes),
                               lambda b, ch: (b, ch, 0, 0)),
        compiler_params=pltpu.CompilerParams(
            dimension_semantics=("parallel", "parallel"),
            vmem_limit_bytes=vmem_limit,
        ),
    )(score, tgt)

    # Tiny epilogue in plain JAX: reduce partial sums, dice ratio, weighting.
    sums = jnp.sum(partial, axis=(0, 1))          # (3, C)
    intersect, z_sum, y_sum = sums[0], sums[1], sums[2]
    dice = 1.0 - (2.0 * intersect + SMOOTH) / (z_sum + y_sum + SMOOTH)

    if weight is None:
        w = jnp.ones((n_classes,), jnp.float32)
    else:
        w = jnp.asarray(weight, dtype=jnp.float32)
    return jnp.sum(dice * w) / n_classes


def _reference_dice_loss(inputs, target, n_classes, weight=None, softmax=False):
    """Pure-JAX reference mirroring the PyTorch module."""
    if softmax:
        inputs = jax.nn.softmax(inputs, axis=1)
    target_oh = jnp.stack(
        [(target == i).astype(jnp.float32) for i in range(n_classes)], axis=1
    )
    if weight is None:
        weight = [1.0] * n_classes
    smooth = 1e-5
    loss = 0.0
    for i in range(n_classes):
        score = inputs[:, i].astype(jnp.float32)
        tgt = target_oh[:, i]
        intersect = jnp.sum(score * tgt)
        y_sum = jnp.sum(tgt * tgt)
        z_sum = jnp.sum(score * score)
        dice = 1.0 - (2.0 * intersect + smooth) / (z_sum + y_sum + smooth)
        loss = loss + dice * weight[i]
    return loss / n_classes


if __name__ == "__main__":
    key = jax.random.PRNGKey(0)

    # Test 1: aligned shapes, fused softmax.
    B, C, H, W = 2, 4, 16, 16
    k_in, k_tgt, key = jax.random.split(key, 3)
    inputs = jax.random.normal(k_in, (B, C, H, W), dtype=jnp.float32)
    target = jax.random.randint(k_tgt, (B, H, W), 0, C, dtype=jnp.int32)

    loss1 = jax.block_until_ready(dice_loss(inputs, target, n_classes=C, softmax=True))
    ref1 = _reference_dice_loss(inputs, target, C, softmax=True)
    assert jnp.allclose(loss1, ref1, rtol=2e-5, atol=1e-5), (loss1, ref1)

    # Test 2: same shapes, no softmax.
    loss2 = jax.block_until_ready(dice_loss(inputs, target, n_classes=C, softmax=False))
    ref2 = _reference_dice_loss(inputs, target, C, softmax=False)
    assert jnp.allclose(loss2, ref2, rtol=2e-5, atol=1e-5), (loss2, ref2)

    # Test 3: ragged spatial size (exercises padding + in-kernel mask) + weights.
    B2, C2, H2, W2 = 2, 3, 10, 10
    k_in2, k_tgt2, key = jax.random.split(key, 3)
    inputs2 = jax.random.normal(k_in2, (B2, C2, H2, W2), dtype=jnp.float32)
    target2 = jax.random.randint(k_tgt2, (B2, H2, W2), 0, C2, dtype=jnp.int32)
    wts = [0.2, 0.3, 0.5]

    loss3 = jax.block_until_ready(
        dice_loss(inputs2, target2, n_classes=C2, weight=wts, softmax=True))
    ref3 = _reference_dice_loss(inputs2, target2, C2, weight=wts, softmax=True)
    assert jnp.allclose(loss3, ref3, rtol=2e-5, atol=1e-5), (loss3, ref3)

    print("KERNEL_OK")
</pallas_src>

<mosaic_0001>
module attributes {stable_mosaic.version = 11 : i64} {
  func.func @kernel(%arg0: i32, %arg1: i32, %arg2: memref<1x4x2x128xf32, #tpu.memory_space<vmem>>, %arg3: memref<1x2x128xi32, #tpu.memory_space<vmem>>, %arg4: memref<1x1x3x4xf32, #tpu.memory_space<vmem>>) attributes {dimension_semantics = [#tpu.dimension_semantics<parallel>, #tpu.dimension_semantics<parallel>], iteration_bounds = array<i64: 2, 1>, scalar_prefetch = 0 : i64, scratch_operands = 0 : i64, tpu.core_type = #tpu.core_type<tc>, window_params = [{transform_indices = @transform_0, window_bounds = array<i64: 1, 4, 2, 128>}, {transform_indices = @transform_1, window_bounds = array<i64: 1, 2, 128>}, {transform_indices = @transform_2, window_bounds = array<i64: 1, 1, 3, 4>}]} {
    %c0 = arith.constant 0 : index
    %c0_0 = arith.constant 0 : index
    %c0_1 = arith.constant 0 : index
    %c0_2 = arith.constant 0 : index
    %0 = vector.load %arg2[%c0, %c0_0, %c0_1, %c0_2] : memref<1x4x2x128xf32, #tpu.memory_space<vmem>>, vector<1x4x2x128xf32>
    %1 = vector.shape_cast %0 : vector<1x4x2x128xf32> to vector<4x2x128xf32>
    %c0_3 = arith.constant 0 : index
    %c0_4 = arith.constant 0 : index
    %c0_5 = arith.constant 0 : index
    %2 = vector.load %arg3[%c0_3, %c0_4, %c0_5] : memref<1x2x128xi32, #tpu.memory_space<vmem>>, vector<1x2x128xi32>
    %3 = vector.shape_cast %2 : vector<1x2x128xi32> to vector<2x128xi32>
    %cst = arith.constant dense<0xFF800000> : vector<2x128xf32>
    %4 = vector.multi_reduction <maximumf>, %1, %cst [0] : vector<4x2x128xf32> to vector<2x128xf32>
    %5 = vector.shape_cast %4 : vector<2x128xf32> to vector<1x2x128xf32>
    %6 = vector.broadcast %5 : vector<1x2x128xf32> to vector<4x2x128xf32>
    %7 = arith.subf %1, %6 : vector<4x2x128xf32>
    %8 = math.exp %7 : vector<4x2x128xf32>
    %cst_6 = arith.constant dense<0.000000e+00> : vector<2x128xf32>
    %9 = vector.multi_reduction <add>, %8, %cst_6 [0] : vector<4x2x128xf32> to vector<2x128xf32>
    %10 = vector.shape_cast %9 : vector<2x128xf32> to vector<1x2x128xf32>
    %11 = vector.broadcast %10 : vector<1x2x128xf32> to vector<4x2x128xf32>
    %12 = arith.divf %8, %11 : vector<4x2x128xf32>
    %13 = tpu.iota {dimensions = array<i32: 0>} : vector<3x4xi32>
    %14 = tpu.iota {dimensions = array<i32: 1>} : vector<3x4xi32>
    %cst_7 = arith.constant 0.000000e+00 : f32
    %15 = vector.broadcast %cst_7 : f32 to vector<3x4xf32>
    %16 = vector.extract_strided_slice %12 {offsets = [0, 0, 0], sizes = [1, 2, 128], strides = [1, 1, 1]} : vector<4x2x128xf32> to vector<1x2x128xf32>
    %17 = vector.shape_cast %16 : vector<1x2x128xf32> to vector<2x128xf32>
    %c0_i32 = arith.constant 0 : i32
    %18 = vector.broadcast %c0_i32 : i32 to vector<2x128xi32>
    %19 = arith.cmpi eq, %3, %18 : vector<2x128xi32>
    %cst_8 = arith.constant 0.000000e+00 : f32
    %20 = vector.broadcast %cst_8 : f32 to vector<2x128xf32>
    %21 = arith.select %19, %17, %20 : vector<2x128xi1>, vector<2x128xf32>
    %22 = vector.shape_cast %21 : vector<2x128xf32> to vector<1x2x128xf32>
    %cst_9 = arith.constant dense<0.000000e+00> : vector<1xf32>
    %23 = vector.multi_reduction <add>, %22, %cst_9 [1, 2] : vector<1x2x128xf32> to vector<1xf32>
    %24 = vector.shape_cast %23 : vector<1xf32> to vector<1x1x1xf32>
    %25 = vector.extract %24[0, 0, 0] : f32 from vector<1x1x1xf32>
    %cst_10 = arith.constant 1.000000e+00 : f32
    %cst_11 = arith.constant 0.000000e+00 : f32
    %26 = vector.broadcast %cst_10 : f32 to vector<2x128xf32>
    %27 = vector.broadcast %cst_11 : f32 to vector<2x128xf32>
    %28 = arith.select %19, %26, %27 : vector<2x128xi1>, vector<2x128xf32>
    %29 = vector.shape_cast %28 : vector<2x128xf32> to vector<1x2x128xf32>
    %cst_12 = arith.constant dense<0.000000e+00> : vector<1xf32>
    %30 = vector.multi_reduction <add>, %29, %cst_12 [1, 2] : vector<1x2x128xf32> to vector<1xf32>
    %31 = vector.shape_cast %30 : vector<1xf32> to vector<1x1x1xf32>
    %32 = vector.extract %31[0, 0, 0] : f32 from vector<1x1x1xf32>
    %33 = arith.mulf %17, %17 : vector<2x128xf32>
    %34 = vector.shape_cast %33 : vector<2x128xf32> to vector<1x2x128xf32>
    %cst_13 = arith.constant dense<0.000000e+00> : vector<1xf32>
    %35 = vector.multi_reduction <add>, %34, %cst_13 [1, 2] : vector<1x2x128xf32> to vector<1xf32>
    %36 = vector.shape_cast %35 : vector<1xf32> to vector<1x1x1xf32>
    %37 = vector.extract %36[0, 0, 0] : f32 from vector<1x1x1xf32>
    %c0_i32_14 = arith.constant 0 : i32
    %38 = vector.broadcast %c0_i32_14 : i32 to vector<3x4xi32>
    %39 = arith.cmpi eq, %13, %38 : vector<3x4xi32>
    %c0_i32_15 = arith.constant 0 : i32
    %40 = vector.broadcast %c0_i32_15 : i32 to vector<3x4xi32>
    %41 = arith.cmpi eq, %14, %40 : vector<3x4xi32>
    %42 = arith.andi %39, %41 : vector<3x4xi1>
    %43 = vector.broadcast %25 : f32 to vector<3x4xf32>
    %44 = arith.select %42, %43, %15 : vector<3x4xi1>, vector<3x4xf32>
    %c1_i32 = arith.constant 1 : i32
    %45 = vector.broadcast %c1_i32 : i32 to vector<3x4xi32>
    %46 = arith.cmpi eq, %13, %45 : vector<3x4xi32>
    %c0_i32_16 = arith.constant 0 : i32
    %47 = vector.broadcast %c0_i32_16 : i32 to vector<3x4xi32>
    %48 = arith.cmpi eq, %14, %47 : vector<3x4xi32>
    %49 = arith.andi %46, %48 : vector<3x4xi1>
    %50 = vector.broadcast %37 : f32 to vector<3x4xf32>
    %51 = arith.select %49, %50, %44 : vector<3x4xi1>, vector<3x4xf32>
    %c2_i32 = arith.constant 2 : i32
    %52 = vector.broadcast %c2_i32 : i32 to vector<3x4xi32>
    %53 = arith.cmpi eq, %13, %52 : vector<3x4xi32>
    %c0_i32_17 = arith.constant 0 : i32
    %54 = vector.broadcast %c0_i32_17 : i32 to vector<3x4xi32>
    %55 = arith.cmpi eq, %14, %54 : vector<3x4xi32>
    %56 = arith.andi %53, %55 : vector<3x4xi1>
    %57 = vector.broadcast %32 : f32 to vector<3x4xf32>
    %58 = arith.select %56, %57, %51 : vector<3x4xi1>, vector<3x4xf32>
    %59 = vector.extract_strided_slice %12 {offsets = [1, 0, 0], sizes = [1, 2, 128], strides = [1, 1, 1]} : vector<4x2x128xf32> to vector<1x2x128xf32>
    %60 = vector.shape_cast %59 : vector<1x2x128xf32> to vector<2x128xf32>
    %c1_i32_18 = arith.constant 1 : i32
    %61 = vector.broadcast %c1_i32_18 : i32 to vector<2x128xi32>
    %62 = arith.cmpi eq, %3, %61 : vector<2x128xi32>
    %cst_19 = arith.constant 0.000000e+00 : f32
    %63 = vector.broadcast %cst_19 : f32 to vector<2x128xf32>
    %64 = arith.select %62, %60, %63 : vector<2x128xi1>, vector<2x128xf32>
    %65 = vector.shape_cast %64 : vector<2x128xf32> to vector<1x2x128xf32>
    %cst_20 = arith.constant dense<0.000000e+00> : vector<1xf32>
    %66 = vector.multi_reduction <add>, %65, %cst_20 [1, 2] : vector<1x2x128xf32> to vector<1xf32>
    %67 = vector.shape_cast %66 : vector<1xf32> to vector<1x1x1xf32>
    %68 = vector.extract %67[0, 0, 0] : f32 from vector<1x1x1xf32>
    %cst_21 = arith.constant 1.000000e+00 : f32
    %cst_22 = arith.constant 0.000000e+00 : f32
    %69 = vector.broadcast %cst_21 : f32 to vector<2x128xf32>
    %70 = vector.broadcast %cst_22 : f32 to vector<2x128xf32>
    %71 = arith.select %62, %69, %70 : vector<2x128xi1>, vector<2x128xf32>
    %72 = vector.shape_cast %71 : vector<2x128xf32> to vector<1x2x128xf32>
    %cst_23 = arith.constant dense<0.000000e+00> : vector<1xf32>
    %73 = vector.multi_reduction <add>, %72, %cst_23 [1, 2] : vector<1x2x128xf32> to vector<1xf32>
    %74 = vector.shape_cast %73 : vector<1xf32> to vector<1x1x1xf32>
    %75 = vector.extract %74[0, 0, 0] : f32 from vector<1x1x1xf32>
    %76 = arith.mulf %60, %60 : vector<2x128xf32>
    %77 = vector.shape_cast %76 : vector<2x128xf32> to vector<1x2x128xf32>
    %cst_24 = arith.constant dense<0.000000e+00> : vector<1xf32>
    %78 = vector.multi_reduction <add>, %77, %cst_24 [1, 2] : vector<1x2x128xf32> to vector<1xf32>
    %79 = vector.shape_cast %78 : vector<1xf32> to vector<1x1x1xf32>
    %80 = vector.extract %79[0, 0, 0] : f32 from vector<1x1x1xf32>
    %c0_i32_25 = arith.constant 0 : i32
    %81 = vector.broadcast %c0_i32_25 : i32 to vector<3x4xi32>
    %82 = arith.cmpi eq, %13, %81 : vector<3x4xi32>
    %c1_i32_26 = arith.constant 1 : i32
    %83 = vector.broadcast %c1_i32_26 : i32 to vector<3x4xi32>
    %84 = arith.cmpi eq, %14, %83 : vector<3x4xi32>
    %85 = arith.andi %82, %84 : vector<3x4xi1>
    %86 = vector.broadcast %68 : f32 to vector<3x4xf32>
    %87 = arith.select %85, %86, %58 : vector<3x4xi1>, vector<3x4xf32>
    %c1_i32_27 = arith.constant 1 : i32
    %88 = vector.broadcast %c1_i32_27 : i32 to vector<3x4xi32>
    %89 = arith.cmpi eq, %13, %88 : vector<3x4xi32>
    %c1_i32_28 = arith.constant 1 : i32
    %90 = vector.broadcast %c1_i32_28 : i32 to vector<3x4xi32>
    %91 = arith.cmpi eq, %14, %90 : vector<3x4xi32>
    %92 = arith.andi %89, %91 : vector<3x4xi1>
    %93 = vector.broadcast %80 : f32 to vector<3x4xf32>
    %94 = arith.select %92, %93, %87 : vector<3x4xi1>, vector<3x4xf32>
    %c2_i32_29 = arith.constant 2 : i32
    %95 = vector.broadcast %c2_i32_29 : i32 to vector<3x4xi32>
    %96 = arith.cmpi eq, %13, %95 : vector<3x4xi32>
    %c1_i32_30 = arith.constant 1 : i32
    %97 = vector.broadcast %c1_i32_30 : i32 to vector<3x4xi32>
    %98 = arith.cmpi eq, %14, %97 : vector<3x4xi32>
    %99 = arith.andi %96, %98 : vector<3x4xi1>
    %100 = vector.broadcast %75 : f32 to vector<3x4xf32>
    %101 = arith.select %99, %100, %94 : vector<3x4xi1>, vector<3x4xf32>
    %102 = vector.extract_strided_slice %12 {offsets = [2, 0, 0], sizes = [1, 2, 128], strides = [1, 1, 1]} : vector<4x2x128xf32> to vector<1x2x128xf32>
    %103 = vector.shape_cast %102 : vector<1x2x128xf32> to vector<2x128xf32>
    %c2_i32_31 = arith.constant 2 : i32
    %104 = vector.broadcast %c2_i32_31 : i32 to vector<2x128xi32>
    %105 = arith.cmpi eq, %3, %104 : vector<2x128xi32>
    %cst_32 = arith.constant 0.000000e+00 : f32
    %106 = vector.broadcast %cst_32 : f32 to vector<2x128xf32>
    %107 = arith.select %105, %103, %106 : vector<2x128xi1>, vector<2x128xf32>
    %108 = vector.shape_cast %107 : vector<2x128xf32> to vector<1x2x128xf32>
    %cst_33 = arith.constant dense<0.000000e+00> : vector<1xf32>
    %109 = vector.multi_reduction <add>, %108, %cst_33 [1, 2] : vector<1x2x128xf32> to vector<1xf32>
    %110 = vector.shape_cast %109 : vector<1xf32> to vector<1x1x1xf32>
    %111 = vector.extract %110[0, 0, 0] : f32 from vector<1x1x1xf32>
    %cst_34 = arith.constant 1.000000e+00 : f32
    %cst_35 = arith.constant 0.000000e+00 : f32
    %112 = vector.broadcast %cst_34 : f32 to vector<2x128xf32>
    %113 = vector.broadcast %cst_35 : f32 to vector<2x128xf32>
    %114 = arith.select %105, %112, %113 : vector<2x128xi1>, vector<2x128xf32>
    %115 = vector.shape_cast %114 : vector<2x128xf32> to vector<1x2x128xf32>
    %cst_36 = arith.constant dense<0.000000e+00> : vector<1xf32>
    %116 = vector.multi_reduction <add>, %115, %cst_36 [1, 2] : vector<1x2x128xf32> to vector<1xf32>
    %117 = vector.shape_cast %116 : vector<1xf32> to vector<1x1x1xf32>
    %118 = vector.extract %117[0, 0, 0] : f32 from vector<1x1x1xf32>
    %119 = arith.mulf %103, %103 : vector<2x128xf32>
    %120 = vector.shape_cast %119 : vector<2x128xf32> to vector<1x2x128xf32>
    %cst_37 = arith.constant dense<0.000000e+00> : vector<1xf32>
    %121 = vector.multi_reduction <add>, %120, %cst_37 [1, 2] : vector<1x2x128xf32> to vector<1xf32>
    %122 = vector.shape_cast %121 : vector<1xf32> to vector<1x1x1xf32>
    %123 = vector.extract %122[0, 0, 0] : f32 from vector<1x1x1xf32>
    %c0_i32_38 = arith.constant 0 : i32
    %124 = vector.broadcast %c0_i32_38 : i32 to vector<3x4xi32>
    %125 = arith.cmpi eq, %13, %124 : vector<3x4xi32>
    %c2_i32_39 = arith.constant 2 : i32
    %126 = vector.broadcast %c2_i32_39 : i32 to vector<3x4xi32>
    %127 = arith.cmpi eq, %14, %126 : vector<3x4xi32>
    %128 = arith.andi %125, %127 : vector<3x4xi1>
    %129 = vector.broadcast %111 : f32 to vector<3x4xf32>
    %130 = arith.select %128, %129, %101 : vector<3x4xi1>, vector<3x4xf32>
    %c1_i32_40 = arith.constant 1 : i32
    %131 = vector.broadcast %c1_i32_40 : i32 to vector<3x4xi32>
    %132 = arith.cmpi eq, %13, %131 : vector<3x4xi32>
    %c2_i32_41 = arith.constant 2 : i32
    %133 = vector.broadcast %c2_i32_41 : i32 to vector<3x4xi32>
    %134 = arith.cmpi eq, %14, %133 : vector<3x4xi32>
    %135 = arith.andi %132, %134 : vector<3x4xi1>
    %136 = vector.broadcast %123 : f32 to vector<3x4xf32>
    %137 = arith.select %135, %136, %130 : vector<3x4xi1>, vector<3x4xf32>
    %c2_i32_42 = arith.constant 2 : i32
    %138 = vector.broadcast %c2_i32_42 : i32 to vector<3x4xi32>
    %139 = arith.cmpi eq, %13, %138 : vector<3x4xi32>
    %c2_i32_43 = arith.constant 2 : i32
    %140 = vector.broadcast %c2_i32_43 : i32 to vector<3x4xi32>
    %141 = arith.cmpi eq, %14, %140 : vector<3x4xi32>
    %142 = arith.andi %139, %141 : vector<3x4xi1>
    %143 = vector.broadcast %118 : f32 to vector<3x4xf32>
    %144 = arith.select %142, %143, %137 : vector<3x4xi1>, vector<3x4xf32>
    %145 = vector.extract_strided_slice %12 {offsets = [3, 0, 0], sizes = [1, 2, 128], strides = [1, 1, 1]} : vector<4x2x128xf32> to vector<1x2x128xf32>
    %146 = vector.shape_cast %145 : vector<1x2x128xf32> to vector<2x128xf32>
    %c3_i32 = arith.constant 3 : i32
    %147 = vector.broadcast %c3_i32 : i32 to vector<2x128xi32>
    %148 = arith.cmpi eq, %3, %147 : vector<2x128xi32>
    %cst_44 = arith.constant 0.000000e+00 : f32
    %149 = vector.broadcast %cst_44 : f32 to vector<2x128xf32>
    %150 = arith.select %148, %146, %149 : vector<2x128xi1>, vector<2x128xf32>
    %151 = vector.shape_cast %150 : vector<2x128xf32> to vector<1x2x128xf32>
    %cst_45 = arith.constant dense<0.000000e+00> : vector<1xf32>
    %152 = vector.multi_reduction <add>, %151, %cst_45 [1, 2] : vector<1x2x128xf32> to vector<1xf32>
    %153 = vector.shape_cast %152 : vector<1xf32> to vector<1x1x1xf32>
    %154 = vector.extract %153[0, 0, 0] : f32 from vector<1x1x1xf32>
    %cst_46 = arith.constant 1.000000e+00 : f32
    %cst_47 = arith.constant 0.000000e+00 : f32
    %155 = vector.broadcast %cst_46 : f32 to vector<2x128xf32>
    %156 = vector.broadcast %cst_47 : f32 to vector<2x128xf32>
    %157 = arith.select %148, %155, %156 : vector<2x128xi1>, vector<2x128xf32>
    %158 = vector.shape_cast %157 : vector<2x128xf32> to vector<1x2x128xf32>
    %cst_48 = arith.constant dense<0.000000e+00> : vector<1xf32>
    %159 = vector.multi_reduction <add>, %158, %cst_48 [1, 2] : vector<1x2x128xf32> to vector<1xf32>
    %160 = vector.shape_cast %159 : vector<1xf32> to vector<1x1x1xf32>
    %161 = vector.extract %160[0, 0, 0] : f32 from vector<1x1x1xf32>
    %162 = arith.mulf %146, %146 : vector<2x128xf32>
    %163 = vector.shape_cast %162 : vector<2x128xf32> to vector<1x2x128xf32>
    %cst_49 = arith.constant dense<0.000000e+00> : vector<1xf32>
    %164 = vector.multi_reduction <add>, %163, %cst_49 [1, 2] : vector<1x2x128xf32> to vector<1xf32>
    %165 = vector.shape_cast %164 : vector<1xf32> to vector<1x1x1xf32>
    %166 = vector.extract %165[0, 0, 0] : f32 from vector<1x1x1xf32>
    %c0_i32_50 = arith.constant 0 : i32
    %167 = vector.broadcast %c0_i32_50 : i32 to vector<3x4xi32>
    %168 = arith.cmpi eq, %13, %167 : vector<3x4xi32>
    %c3_i32_51 = arith.constant 3 : i32
    %169 = vector.broadcast %c3_i32_51 : i32 to vector<3x4xi32>
    %170 = arith.cmpi eq, %14, %169 : vector<3x4xi32>
    %171 = arith.andi %168, %170 : vector<3x4xi1>
    %172 = vector.broadcast %154 : f32 to vector<3x4xf32>
    %173 = arith.select %171, %172, %144 : vector<3x4xi1>, vector<3x4xf32>
    %c1_i32_52 = arith.constant 1 : i32
    %174 = vector.broadcast %c1_i32_52 : i32 to vector<3x4xi32>
    %175 = arith.cmpi eq, %13, %174 : vector<3x4xi32>
    %c3_i32_53 = arith.constant 3 : i32
    %176 = vector.broadcast %c3_i32_53 : i32 to vector<3x4xi32>
    %177 = arith.cmpi eq, %14, %176 : vector<3x4xi32>
    %178 = arith.andi %175, %177 : vector<3x4xi1>
    %179 = vector.broadcast %166 : f32 to vector<3x4xf32>
    %180 = arith.select %178, %179, %173 : vector<3x4xi1>, vector<3x4xf32>
    %c2_i32_54 = arith.constant 2 : i32
    %181 = vector.broadcast %c2_i32_54 : i32 to vector<3x4xi32>
    %182 = arith.cmpi eq, %13, %181 : vector<3x4xi32>
    %c3_i32_55 = arith.constant 3 : i32
    %183 = vector.broadcast %c3_i32_55 : i32 to vector<3x4xi32>
    %184 = arith.cmpi eq, %14, %183 : vector<3x4xi32>
    %185 = arith.andi %182, %184 : vector<3x4xi1>
    %186 = vector.broadcast %161 : f32 to vector<3x4xf32>
    %187 = arith.select %185, %186, %180 : vector<3x4xi1>, vector<3x4xf32>
    %c0_56 = arith.constant 0 : index
    %c0_57 = arith.constant 0 : index
    %c0_58 = arith.constant 0 : index
    %c0_59 = arith.constant 0 : index
    %188 = vector.load %arg4[%c0_56, %c0_57, %c0_58, %c0_59] : memref<1x1x3x4xf32, #tpu.memory_space<vmem>>, vector<1x1x3x4xf32>
    %189 = vector.shape_cast %188 : vector<1x1x3x4xf32> to vector<3x4xf32>
    %190 = vector.shape_cast %187 : vector<3x4xf32> to vector<1x1x3x4xf32>
    tpu.vector_store %arg4[%c0_56, %c0_57, %c0_58, %c0_59], %190 {strides = array<i32>} : memref<1x1x3x4xf32, #tpu.memory_space<vmem>>, vector<1x1x3x4xf32>,
    return
  }
  func.func @transform_0(%arg0: i32, %arg1: i32) -> (i32, i32, i32, i32) {
    %c0_i32 = arith.constant 0 : i32
    %c0_i32_0 = arith.constant 0 : i32
    %c0_i32_1 = arith.constant 0 : i32
    return %arg0, %c0_i32, %arg1, %c0_i32_0 : i32, i32, i32, i32
  }
  func.func @transform_1(%arg0: i32, %arg1: i32) -> (i32, i32, i32) {
    %c0_i32 = arith.constant 0 : i32
    %c0_i32_0 = arith.constant 0 : i32
    return %arg0, %arg1, %c0_i32 : i32, i32, i32
  }
  func.func @transform_2(%arg0: i32, %arg1: i32) -> (i32, i32, i32, i32) {
    %c0_i32 = arith.constant 0 : i32
    %c0_i32_0 = arith.constant 0 : i32
    %c0_i32_1 = arith.constant 0 : i32
    return %arg0, %arg1, %c0_i32, %c0_i32_0 : i32, i32, i32, i32
  }
}

</mosaic_0001>

<llo_original>
// kernel: dice_loss.1
$region0: #{dice_loss.1}
  #allocation0 [shape = 'u32[]', space=smem, size = 0x4, offset = 0x4, fixed_abs, tag = 'smem constant byte address 0x4 - core index']
  #allocation1 [shape = 'u32[72,128]{1,0:T(1,128)}', space=vmem, size = 0x9000, scoped, tag = 'internal scratch']
  %s0 = inlined_call_operand.vmem [shape: f32[2,4,2,128], index: 0, kind: input, shape index: {}]
  %s1 = inlined_call_operand.vmem [shape: s32[2,2,128], index: 1, kind: input, shape index: {}]
  %s2 = inlined_call_operand.vmem [shape: f32[2,1,3,4], index: 2, kind: output, shape index: {}]
  %s3 = sld [smem:[#allocation0]]
  $region41: #{dice_loss.1} parent=0
    _
  %s5 = ssub.s32 1, %s3
  %s6 = scalar_select 0, %s5, %s3
  loop: start=0, step=1, limit=4
  $region2: #{dice_loss.1} parent=0 // loop_pre_header
    _
  $region3: #{dice_loss.1} parent=0 // loop_header
    %s8 = sphi 0, %s12
    %p9 = scmp.ge.s32.totalorder %s8, 4
    %s15 = sphi 0, %s27
    %s16 = sphi 0, %s23
    %s17 = sphi 0, %s15
    %s18 = sphi 0, %s16
    %s19 = sphi 0, %s17
    %s20 = sphi 0, %s18
    %s32 = sphi 0, %s34
    %s35 = sphi 0, %s32
    %s36 = sphi 0, %s35
    %s52 = sphi 0, %s36
    %s60 = sphi 0, %s62
    %s63 = sphi 0, %s60
    %s64 = sphi 0, %s63
    %s80 = sphi 0, %s64
    %s88 = sphi 0, %s90
    %s91 = sphi 0, %s88
    %s92 = sphi 0, %s91
    %s108 = sphi 0, %s92
  $region4: #{dice_loss.1} parent=0 // loop_header_branch
    %11 = sbr.rel (%p9) target = $region8
  $region5: #{dice_loss.1} parent=0 // loop_body
    %s13 = ssub.s32 %s8, 1
    %s14 = ssub.s32 %s8, 2
    %s21 = sadd.s32 1, %s16
    %p22 = scmp.ge.s32.totalorder %s21, 1
    %s23 = scalar_select %p22, 0, %s21
    %s24 = sadd.s32 1, %s15
    %s25 = scalar_select %p22, %s24, %s15
    %p26 = scmp.ge.s32.totalorder %s25, 2
    %s27 = scalar_select %p26, 0, %s25
    %s28 = ssub.s32 %s15, %s27
    %s29 = ssub.s32 %s16, %s23
    %s30 = sor.u32 %s28, %s29
    %p31 = scmp.eq.s32.totalorder %s30, 0
    %s33 = sadd.s32 %s32, 1
    %s34 = scalar_select %p31, %s32, %s33
    %p37 = pneg %p31
    %p38 = scmp.eq.s32.totalorder %s8, 1
    %p39 = por %p37, %p38
    %p40 = scmp.ne.s32.totalorder %s32, %s35
    %p41 = scmp.eq.s32.totalorder %s8, 0
    %p42 = por %p40, %p41
    %p43 = scmp.ne.s32.totalorder %s32, %s35
    %p44 = scmp.eq.s32.totalorder %s13, 1
    %p45 = por %p43, %p44
    %p46 = scmp.ne.s32.totalorder %s35, %s36
    %p47 = scmp.eq.s32.totalorder %s13, 0
    %p48 = por %p46, %p47
    %p49 = scmp.ne.s32.totalorder %s35, %s36
    %p50 = scmp.eq.s32.totalorder %s14, 1
    %p51 = por %p49, %p50
    %p53 = scmp.ne.s32.totalorder %s36, %s52
    %p54 = scmp.eq.s32.totalorder %s14, 0
    %p55 = por %p53, %p54
    %s56 = ssub.s32 %s15, %s27
    %s57 = ssub.s32 %s16, %s23
    %s58 = sor.u32 %s56, %s57
    %p59 = scmp.eq.s32.totalorder %s58, 0
    %s61 = sadd.s32 %s60, 1
    %s62 = scalar_select %p59, %s60, %s61
    %p65 = pneg %p59
    %p66 = scmp.eq.s32.totalorder %s8, 1
    %p67 = por %p65, %p66
    %p68 = scmp.ne.s32.totalorder %s60, %s63
    %p69 = scmp.eq.s32.totalorder %s8, 0
    %p70 = por %p68, %p69
    %p71 = scmp.ne.s32.totalorder %s60, %s63
    %p72 = scmp.eq.s32.totalorder %s13, 1
    %p73 = por %p71, %p72
    %p74 = scmp.ne.s32.totalorder %s63, %s64
    %p75 = scmp.eq.s32.totalorder %s13, 0
    %p76 = por %p74, %p75
    %p77 = scmp.ne.s32.totalorder %s63, %s64
    %p78 = scmp.eq.s32.totalorder %s14, 1
    %p79 = por %p77, %p78
    %p81 = scmp.ne.s32.totalorder %s64, %s80
    %p82 = scmp.eq.s32.totalorder %s14, 0
    %p83 = por %p81, %p82
    %s84 = ssub.s32 %s15, %s27
    %s85 = ssub.s32 %s16, %s23
    %s86 = sor.u32 %s84, %s85
    %p87 = scmp.eq.s32.totalorder %s86, 0
    %s89 = sadd.s32 %s88, 1
    %s90 = scalar_select %p87, %s88, %s89
    %p93 = pneg %p87
    %p94 = scmp.eq.s32.totalorder %s8, 1
    %p95 = por %p93, %p94
    %p96 = scmp.ne.s32.totalorder %s88, %s91
    %p97 = scmp.eq.s32.totalorder %s8, 0
    %p98 = por %p96, %p97
    %p99 = scmp.ne.s32.totalorder %s88, %s91
    %p100 = scmp.eq.s32.totalorder %s13, 1
    %p101 = por %p99, %p100
    %p102 = scmp.ne.s32.totalorder %s91, %s92
    %p103 = scmp.eq.s32.totalorder %s13, 0
    %p104 = por %p102, %p103
    %p105 = scmp.ne.s32.totalorder %s91, %s92
    %p106 = scmp.eq.s32.totalorder %s14, 1
    %p107 = por %p105, %p106
    %p109 = scmp.ne.s32.totalorder %s92, %s108
    %p110 = scmp.eq.s32.totalorder %s14, 0
    %p111 = por %p109, %p110
    %p112 = scmp.le.s32.totalorder 1, %s8
    %p113 = scmp.lt.s32.totalorder %s8, 3
    %p114 = pnand %p112, %p113
    %p115 = pneg %p114
    // Predicated region
    $region9: #{dice_loss.1} parent=5 // pred_check
      _
    $region10: #{dice_loss.1} parent=5 // pred_check_branch
      %117 = sbr.rel (%p114) target = $region12
    $region11: #{dice_loss.1} parent=5 // pred_region
      %s118 = ssub.s32 %s8, 1
    $region12: #{dice_loss.1} parent=5 // pred_fallthru
      _
    %p119 = scmp.lt.s32.totalorder %s8, 2
    // Predicated region
    $region13: #{dice_loss.1} parent=5 // pred_check
      %p120 = pneg %p119
    $region14: #{dice_loss.1} parent=5 // pred_check_branch
      %122 = sbr.rel (%p120) target = $region16
    $region15: #{dice_loss.1} parent=5 // pred_region
      // Predicated region
      $region17: #{dice_loss.1} parent=15 // pred_check
        %p123 = pneg %p42
      $region18: #{dice_loss.1} parent=15 // pred_check_branch
        %125 = sbr.rel (%p123) target = $region20
      $region19: #{dice_loss.1} parent=15 // pred_region
        %p126 = scmp.lt.s32.totalorder %s15, 1
        %s127 = scalar_select %p126, %s15, 1
        %p128 = scmp.lt.s32.totalorder %s16, 0
        %s129 = scalar_select %p128, %s16, 0
        %s130 = smul.addr %s127, 4
        %s131 = sadd.s32 %s129, %s130
        %s132 = smul.addr %s131, 2
        %s133 = scalar_lea.vmem %s0, %s132
      $region20: #{dice_loss.1} parent=15 // pred_fallthru
        _
      // Predicated region
      $region21: #{dice_loss.1} parent=15 // pred_check
        %p134 = pneg %p70
      $region22: #{dice_loss.1} parent=15 // pred_check_branch
        %136 = sbr.rel (%p134) target = $region24
      $region23: #{dice_loss.1} parent=15 // pred_region
        %p137 = scmp.lt.s32.totalorder %s15, 1
        %s138 = scalar_select %p137, %s15, 1
        %p139 = scmp.lt.s32.totalorder %s16, 0
        %s140 = scalar_select %p139, %s16, 0
        %s141 = sadd.s32 %s140, %s138
        %s142 = smul.addr %s141, 2
        %s143 = scalar_lea.vmem %s1, %s142
      $region24: #{dice_loss.1} parent=15 // pred_fallthru
        _
    $region16: #{dice_loss.1} parent=5 // pred_fallthru
      _
    %p144 = scmp.le.s32.totalorder 1, %s8
    %p145 = scmp.lt.s32.totalorder %s8, 3
    %p146 = pnand %p144, %p145
    %p147 = pneg %p146
    // Predicated region
    $region25: #{dice_loss.1} parent=5 // pred_check
      _
    $region26: #{dice_loss.1} parent=5 // pred_check_branch
      %149 = sbr.rel (%p146) target = $region28
    $region27: #{dice_loss.1} parent=5 // pred_region
      %s150 = ssub.s32 %s8, 1
      %p151 = scmp.lt.s32.totalorder %s17, 1
      %s152 = scalar_select %p151, %s17, 1
      %p153 = scmp.lt.s32.totalorder %s18, 0
      %s154 = scalar_select %p153, %s18, 0
      %s155 = smul.addr %s152, 4
      %s156 = sadd.s32 %s154, %s155
      %s157 = smul.addr %s156, 2
      %s158 = scalar_lea.vmem %s0, %s157
      %p159 = pneg %p48
      %p160 = pneg %p45
      %p161 = scmp.lt.s32.totalorder %s17, 1
      %s162 = scalar_select %p161, %s17, 1
      %p163 = scmp.lt.s32.totalorder %s18, 0
      %s164 = scalar_select %p163, %s18, 0
      %s165 = sadd.s32 %s164, %s162
      %s166 = smul.addr %s165, 2
      %s167 = scalar_lea.vmem %s1, %s166
      %p168 = pneg %p76
      %p169 = pneg %p73
      %p170 = pneg %p104
      %p171 = pneg %p101
      %p172 = scmp.lt.s32.totalorder %s17, 1
      %s173 = scalar_select %p172, %s17, 1
      %p174 = scmp.lt.s32.totalorder %s18, 0
      %s175 = scalar_select %p174, %s18, 0
      %s176 = sadd.s32 %s175, %s173
      %s177 = smul.addr %s176, 4
      %s178 = scalar_lea.vmem %s2, %s177
      %p179 = scmp.lt.s32.totalorder %s17, 1
      %s180 = scalar_select %p179, %s17, 1
      %p181 = scmp.lt.s32.totalorder %s18, 0
      %s182 = scalar_select %p181, %s18, 0
      %s183 = smul.addr %s180, 4
      %s184 = sadd.s32 %s182, %s183
      %s185 = smul.addr %s184, 2
      %s186 = scalar_lea.vmem %s0, %s185
      %p187 = scmp.lt.s32.totalorder %s17, 1
      %s188 = scalar_select %p187, %s17, 1
      %p189 = scmp.lt.s32.totalorder %s18, 0
      %s190 = scalar_select %p189, %s18, 0
      %s191 = sadd.s32 %s190, %s188
      %s192 = smul.addr %s191, 2
      %s193 = scalar_lea.vmem %s1, %s192
      %p194 = scmp.lt.s32.totalorder %s17, 1
      %s195 = scalar_select %p194, %s17, 1
      %p196 = scmp.lt.s32.totalorder %s18, 0
      %s197 = scalar_select %p196, %s18, 0
      %s198 = sadd.s32 %s197, %s195
      %s199 = smul.addr %s198, 4
      %s200 = scalar_lea.vmem %s2, %s199
      %v201 = vld [vmem:[%s186] sm:$0x3]
      %v202 = vld [vmem:[%s186 + $0x2] sm:$0x3]
      %v203 = vld [vmem:[%s186 + $0x4] sm:$0x3]
      %v204 = vld [vmem:[%s186 + $0x6] sm:$0x3]
      %v205 = vld [vmem:[%s193] sm:$0x3]
      %vm206 = vcmask 1041408
      %v207 = vsel %vm206, %v201, -inf
      %v208 = vsel %vm206, %v202, -inf
      %v209 = vsel %vm206, %v203, -inf
      %v210 = vsel %vm206, %v204, -inf
      %v211 = vmax.f32 %v207, %v208
      %v212 = vmax.f32 %v209, %v210
      %v213 = vmax.f32 %v211, %v212
      %v214 = vsub.f32 %v201, %v213
      %v215 = vsub.f32 %v202, %v213
      %v216 = vsub.f32 %v203, %v213
      %v217 = vsub.f32 %v204, %v213
      %v218 = vmul.f32 %v214, 1.442695
      %v219 = vpow.pop %v218
      %v220 = vmul.f32 %v215, 1.442695
      %v221 = vpow.pop %v220
      %v222 = vmul.f32 %v216, 1.442695
      %v223 = vpow.pop %v222
      %v224 = vmul.f32 %v217, 1.442695
      %v225 = vpow.pop %v224
      %v226 = vsel %vm206, %v219, 0.0
      %v227 = vsel %vm206, %v221, 0.0
      %v228 = vadd.f32 %v226, %v227
      %v229 = vsel %vm206, %v223, 0.0
      %v230 = vadd.f32 %v228, %v229
      %v231 = vsel %vm206, %v225, 0.0
      %v232 = vadd.f32 %v230, %v231
      %v233 = vrcp.pop %v232
      %v234 = vmul.f32 %v232, %v233
      %v235 = vsub.f32 1.0, %v234
      %v236 = vmul.f32 %v233, %v235
      %v237 = vadd.f32 %v233, %v236
      %vm238 = vweird.f32 %v232
      %vm239 = vweird.f32 %v233
      %vm240 = vmor %vm238, %vm239
      %v241 = vsel %vm240, %v233, %v237
      %v242 = vand.u32 2147483647, %v232
      %vm243 = vcmp.eq.f32.partialorder %v242, 8.507059e+37
      %v244 = vand.u32 %v232, 2147483648
      %v245 = vor.u32 1.1754944e-38, %v244
      %v246 = vsel %vm243, %v245, %v241
      %v247 = vmul.f32 %v219, %v246
      %v248 = vmul.f32 %v221, %v246
      %v249 = vmul.f32 %v223, %v246
      %v250 = vmul.f32 %v225, %v246
      %v251 = vlaneseq
      %v252 = vshrl.u32 %v251, 7
      %v253 = vlaneseq
      %v254 = vand.u32 %v253, 127
      %vm255 = vcmp.eq.s32.totalorder %v205, 0
      %v256 = vsel %vm255, %v247, 0.0
      %v257 = vsel %vm206, %v256, 0.0
      %258 = vadd.xlane.f32.xlu0 %v257
      %v259 = vpop.xlane.xlu0 %258
      %v260 = vrot.slane %v259, 4
      %v261 = vadd.f32 %v259, %v260
      %v262 = vrot.slane %v261, 2
      %v263 = vadd.f32 %v261, %v262
      %v264 = vrot.slane %v263, 1
      %v265 = vadd.f32 %v263, %v264
      %s266 = vtos %v265
      %v267 = vsel %vm255, 1.0, 0.0
      %v268 = vsel %vm206, %v267, 0.0
      %269 = vadd.xlane.f32.xlu0 %v268
      %v270 = vpop.xlane.xlu0 %269
      %v271 = vrot.slane %v270, 4
      %v272 = vadd.f32 %v270, %v271
      %v273 = vrot.slane %v272, 2
      %v274 = vadd.f32 %v272, %v273
      %v275 = vrot.slane %v274, 1
      %v276 = vadd.f32 %v274, %v275
      %s277 = vtos %v276
      %v278 = vmul.f32 %v247, %v247
      %v279 = vsel %vm206, %v278, 0.0
      %280 = vadd.xlane.f32.xlu0 %v279
      %v281 = vpop.xlane.xlu0 %280
      %v282 = vrot.slane %v281, 4
      %v283 = vadd.f32 %v281, %v282
      %v284 = vrot.slane %v283, 2
      %v285 = vadd.f32 %v283, %v284
      %v286 = vrot.slane %v285, 1
      %v287 = vadd.f32 %v285, %v286
      %s288 = vtos %v287
      %vm289 = vcmp.eq.s32.totalorder %v252, 0
      %vm290 = vcmp.eq.s32.totalorder %v254, 0
      %vm291 = vmand %vm289, %vm290
      %v292 = vstv %s266
      %v293 = vsel %vm291, %v292, 0.0
      %vm294 = vcmp.eq.s32.totalorder %v252, 1
      %vm295 = vmand %vm294, %vm290
      %v296 = vstv %s288
      %v297 = vsel %vm295, %v296, %v293
      %vm298 = vcmp.eq.s32.totalorder %v252, 2
      %vm299 = vmand %vm298, %vm290
      %v300 = vstv %s277
      %v301 = vsel %vm299, %v300, %v297
      %vm302 = vcmp.eq.s32.totalorder %v205, 1
      %v303 = vsel %vm302, %v248, 0.0
      %v304 = vsel %vm206, %v303, 0.0
      %305 = vadd.xlane.f32.xlu0 %v304
      %v306 = vpop.xlane.xlu0 %305
      %v307 = vrot.slane %v306, 4
      %v308 = vadd.f32 %v306, %v307
      %v309 = vrot.slane %v308, 2
      %v310 = vadd.f32 %v308, %v309
      %v311 = vrot.slane %v310, 1
      %v312 = vadd.f32 %v310, %v311
      %s313 = vtos %v312
      %v314 = vsel %vm302, 1.0, 0.0
      %v315 = vsel %vm206, %v314, 0.0
      %316 = vadd.xlane.f32.xlu0 %v315
      %v317 = vpop.xlane.xlu0 %316
      %v318 = vrot.slane %v317, 4
      %v319 = vadd.f32 %v317, %v318
      %v320 = vrot.slane %v319, 2
      %v321 = vadd.f32 %v319, %v320
      %v322 = vrot.slane %v321, 1
      %v323 = vadd.f32 %v321, %v322
      %s324 = vtos %v323
      %v325 = vmul.f32 %v248, %v248
      %v326 = vsel %vm206, %v325, 0.0
      %327 = vadd.xlane.f32.xlu0 %v326
      %v328 = vpop.xlane.xlu0 %327
      %v329 = vrot.slane %v328, 4
      %v330 = vadd.f32 %v328, %v329
      %v331 = vrot.slane %v330, 2
      %v332 = vadd.f32 %v330, %v331
      %v333 = vrot.slane %v332, 1
      %v334 = vadd.f32 %v332, %v333
      %s335 = vtos %v334
      %vm336 = vcmp.eq.s32.totalorder %v254, 1
      %vm337 = vmand %vm289, %vm336
      %v338 = vstv %s313
      %v339 = vsel %vm337, %v338, %v301
      %vm340 = vmand %vm294, %vm336
      %v341 = vstv %s335
      %v342 = vsel %vm340, %v341, %v339
      %vm343 = vmand %vm298, %vm336
      %v344 = vstv %s324
      %v345 = vsel %vm343, %v344, %v342
      %vm346 = vcmp.eq.s32.totalorder %v205, 2
      %v347 = vsel %vm346, %v249, 0.0
      %v348 = vsel %vm206, %v347, 0.0
      %349 = vadd.xlane.f32.xlu0 %v348
      %v350 = vpop.xlane.xlu0 %349
      %v351 = vrot.slane %v350, 4
      %v352 = vadd.f32 %v350, %v351
      %v353 = vrot.slane %v352, 2
      %v354 = vadd.f32 %v352, %v353
      %v355 = vrot.slane %v354, 1
      %v356 = vadd.f32 %v354, %v355
      %s357 = vtos %v356
      %v358 = vsel %vm346, 1.0, 0.0
      %v359 = vsel %vm206, %v358, 0.0
      %360 = vadd.xlane.f32.xlu0 %v359
      %v361 = vpop.xlane.xlu0 %360
      %v362 = vrot.slane %v361, 4
      %v363 = vadd.f32 %v361, %v362
      %v364 = vrot.slane %v363, 2
      %v365 = vadd.f32 %v363, %v364
      %v366 = vrot.slane %v365, 1
      %v367 = vadd.f32 %v365, %v366
      %s368 = vtos %v367
      %v369 = vmul.f32 %v249, %v249
      %v370 = vsel %vm206, %v369, 0.0
      %371 = vadd.xlane.f32.xlu0 %v370
      %v372 = vpop.xlane.xlu0 %371
      %v373 = vrot.slane %v372, 4
      %v374 = vadd.f32 %v372, %v373
      %v375 = vrot.slane %v374, 2
      %v376 = vadd.f32 %v374, %v375
      %v377 = vrot.slane %v376, 1
      %v378 = vadd.f32 %v376, %v377
      %s379 = vtos %v378
      %vm380 = vcmp.eq.s32.totalorder %v254, 2
      %vm381 = vmand %vm289, %vm380
      %v382 = vstv %s357
      %v383 = vsel %vm381, %v382, %v345
      %vm384 = vmand %vm294, %vm380
      %v385 = vstv %s379
      %v386 = vsel %vm384, %v385, %v383
      %vm387 = vmand %vm298, %vm380
      %v388 = vstv %s368
      %v389 = vsel %vm387, %v388, %v386
      %vm390 = vcmp.eq.s32.totalorder %v205, 3
      %v391 = vsel %vm390, %v250, 0.0
      %v392 = vsel %vm206, %v391, 0.0
      %393 = vadd.xlane.f32.xlu0 %v392
      %v394 = vpop.xlane.xlu0 %393
      %v395 = vrot.slane %v394, 4
      %v396 = vadd.f32 %v394, %v395
      %v397 = vrot.slane %v396, 2
      %v398 = vadd.f32 %v396, %v397
      %v399 = vrot.slane %v398, 1
      %v400 = vadd.f32 %v398, %v399
      %s401 = vtos %v400
      %v402 = vsel %vm390, 1.0, 0.0
      %v403 = vsel %vm206, %v402, 0.0
      %404 = vadd.xlane.f32.xlu0 %v403
      %v405 = vpop.xlane.xlu0 %404
      %v406 = vrot.slane %v405, 4
      %v407 = vadd.f32 %v405, %v406
      %v408 = vrot.slane %v407, 2
      %v409 = vadd.f32 %v407, %v408
      %v410 = vrot.slane %v409, 1
      %v411 = vadd.f32 %v409, %v410
      %s412 = vtos %v411
      %v413 = vmul.f32 %v250, %v250
      %v414 = vsel %vm206, %v413, 0.0
      %415 = vadd.xlane.f32.xlu0 %v414
      %v416 = vpop.xlane.xlu0 %415
      %v417 = vrot.slane %v416, 4
      %v418 = vadd.f32 %v416, %v417
      %v419 = vrot.slane %v418, 2
      %v420 = vadd.f32 %v418, %v419
      %v421 = vrot.slane %v420, 1
      %v422 = vadd.f32 %v420, %v421
      %s423 = vtos %v422
      %vm424 = vcmp.eq.s32.totalorder %v254, 3
      %vm425 = vmand %vm289, %vm424
      %v426 = vstv %s401
      %v427 = vsel %vm425, %v426, %v389
      %vm428 = vmand %vm294, %vm424
      %v429 = vstv %s423
      %v430 = vsel %vm428, %v429, %v427
      %vm431 = vmand %vm298, %vm424
      %v432 = vstv %s412
      %v433 = vsel %vm431, %v432, %v430
      %vm434 = vcmask 26624
      %435 = vst.msk [vmem:[%s200] sm:$0x7] %vm434, %v433
      %p436 = scmp.lt.s32.totalorder %s17, 1
      %s437 = scalar_select %p436, %s17, 1
      %p438 = scmp.lt.s32.totalorder %s18, 0
      %s439 = scalar_select %p438, %s18, 0
      %s440 = sadd.s32 %s439, %s437
      %s441 = smul.addr %s440, 4
      %s442 = scalar_lea.vmem %s2, %s441
      // Predicated region
      $region29: #{dice_loss.1} parent=27 // pred_check
        %p443 = pneg %p101
      $region30: #{dice_loss.1} parent=27 // pred_check_branch
        %445 = sbr.rel (%p443) target = $region32
      $region31: #{dice_loss.1} parent=27 // pred_region
        _
      $region32: #{dice_loss.1} parent=27 // pred_fallthru
        _
    $region28: #{dice_loss.1} parent=5 // pred_fallthru
      _
    %p446 = scmp.le.s32.totalorder 2, %s8
    // Predicated region
    $region33: #{dice_loss.1} parent=5 // pred_check
      %p447 = pneg %p446
    $region34: #{dice_loss.1} parent=5 // pred_check_branch
      %449 = sbr.rel (%p447) target = $region36
    $region35: #{dice_loss.1} parent=5 // pred_region
      %s450 = ssub.s32 %s8, 2
      // Predicated region
      $region37: #{dice_loss.1} parent=35 // pred_check
        %p451 = pneg %p107
      $region38: #{dice_loss.1} parent=35 // pred_check_branch
        %453 = sbr.rel (%p451) target = $region40
      $region39: #{dice_loss.1} parent=35 // pred_region
        %p454 = scmp.lt.s32.totalorder %s19, 1
        %s455 = scalar_select %p454, %s19, 1
        %p456 = scmp.lt.s32.totalorder %s20, 0
        %s457 = scalar_select %p456, %s20, 0
        %s458 = sadd.s32 %s457, %s455
        %s459 = smul.addr %s458, 4
        %s460 = scalar_lea.vmem %s2, %s459
      $region40: #{dice_loss.1} parent=35 // pred_fallthru
        _
    $region36: #{dice_loss.1} parent=5 // pred_fallthru
      _
  $region6: #{dice_loss.1} parent=0 // loop_footer
    %s12 = sadd.s32 1, %s8
  $region7: #{dice_loss.1} parent=0 // loop_footer_branch
    %7 = sbr.rel target = $region3
  $region8: #{dice_loss.1} parent=0 // loop_exit
    _

</llo_original>
